<compile_context>
chip_gen: v5e
topology: v5e:2x2
jax: 0.10.0
libtpu: 0.0.40
codegen_flags: <defaults>
</compile_context>

<pallas_src>
import functools

import jax
import jax.numpy as jnp
from jax.experimental import pallas as pl
from jax.experimental.pallas import tpu as pltpu


def _round_up(x: int, m: int) -> int:
    return ((x + m - 1) // m) * m


def _bmm_kernel(coeff_ref, x_ref, o_ref, acc_ref):
    """One (tm, tk) @ (tk, tn) MXU step; accumulates over the K grid axis."""
    k = pl.program_id(3)

    @pl.when(k == 0)
    def _init():
        acc_ref[...] = jnp.zeros_like(acc_ref)

    acc_ref[...] += jnp.dot(
        coeff_ref[...], x_ref[...], preferred_element_type=jnp.float32
    )

    @pl.when(k == pl.num_programs(3) - 1)
    def _finalize():
        o_ref[...] = acc_ref[...].astype(o_ref.dtype)


@functools.partial(
    jax.jit, static_argnames=("max_tile_m", "max_tile_n", "max_tile_k")
)
def matrix_reconstruction(coeff, x, *, max_tile_m=512, max_tile_n=512, max_tile_k=512):
    """Batched matmul: (B, nbow, ntopic) @ (B, ntopic, D) -> (B, nbow, D)."""
    B, nbow, ntopic = coeff.shape
    Bx, ntopic_x, D = x.shape
    assert B == Bx and ntopic == ntopic_x

    out_dtype = jnp.result_type(coeff.dtype, x.dtype)

    # MXU-aligned, lane-dense tiles (multiples of 128), capped at 512.
    tm = min(max_tile_m, _round_up(nbow, 128))
    tn = min(max_tile_n, _round_up(D, 128))
    tk = min(max_tile_k, _round_up(ntopic, 128))

    # Pad the logical dims up to whole tiles (zeros are exact for matmul).
    Mp = _round_up(nbow, tm)
    Np = _round_up(D, tn)
    Kp = _round_up(ntopic, tk)

    # Advisory cost for XLA scheduling, based on the *logical* problem.
    itemsize_c = jnp.dtype(coeff.dtype).itemsize
    itemsize_x = jnp.dtype(x.dtype).itemsize
    itemsize_o = jnp.dtype(out_dtype).itemsize
    cost = pl.CostEstimate(
        flops=2 * B * nbow * ntopic * D,
        transcendentals=0,
        bytes_accessed=(
            B * nbow * ntopic * itemsize_c
            + B * ntopic * D * itemsize_x
            + B * nbow * D * itemsize_o
        ),
    )

    if (Mp, Kp) != (nbow, ntopic):
        coeff = jnp.pad(coeff, ((0, 0), (0, Mp - nbow), (0, Kp - ntopic)))
    if (Kp, Np) != (ntopic, D):
        x = jnp.pad(x, ((0, 0), (0, Kp - ntopic), (0, Np - D)))

    grid = (B, Mp // tm, Np // tn, Kp // tk)

    out_padded = pl.pallas_call(
        _bmm_kernel,
        out_shape=jax.ShapeDtypeStruct((B, Mp, Np), out_dtype),
        grid_spec=pltpu.PrefetchScalarGridSpec(
            num_scalar_prefetch=0,
            grid=grid,
            in_specs=[
                # coeff tile: (tm, tk) of batch b, M-block i, K-block k.
                pl.BlockSpec((pl.Squeezed(), tm, tk), lambda b, i, j, k: (b, i, k)),
                # input tile: (tk, tn) of batch b, K-block k, N-block j.
                pl.BlockSpec((pl.Squeezed(), tk, tn), lambda b, i, j, k: (b, k, j)),
            ],
            # Output block is invariant over k -> stays resident as the accumulator.
            out_specs=pl.BlockSpec((pl.Squeezed(), tm, tn), lambda b, i, j, k: (b, i, j)),
            scratch_shapes=[pltpu.VMEM((tm, tn), jnp.float32)],
        ),
        compiler_params=pltpu.CompilerParams(
            dimension_semantics=("parallel", "parallel", "parallel", "arbitrary"),
            vmem_limit_bytes=32 * 1024 * 1024,
        ),
        cost_estimate=cost,
    )(coeff, x)

    if (Mp, Np) != (nbow, D):
        return out_padded[:, :nbow, :D]
    return out_padded


if __name__ == "__main__":
    # Small shapes consistent with the module's __init__/forward:
    #   coeff: (batch_size, nbow, ntopic)   -- the nn.Parameter
    #   input: (batch_size, ntopic, D)
    batch_size, nbow, ntopic, D = 2, 8, 32, 16

    key = jax.random.PRNGKey(0)
    k_coeff, k_x = jax.random.split(key)
    coeff = jax.random.normal(k_coeff, (batch_size, nbow, ntopic), dtype=jnp.float32)
    x = jax.random.normal(k_x, (batch_size, ntopic, D), dtype=jnp.float32)

    out = jax.block_until_ready(matrix_reconstruction(coeff, x))
    ref = jnp.einsum("bnt,btd->bnd", coeff, x)
    assert out.shape == (batch_size, nbow, D)
    assert jnp.allclose(out, ref, atol=1e-5, rtol=1e-5)

    # Larger, non-aligned shapes: exercises M/N padding and multi-tile K
    # accumulation (grid with K_tiles > 1) on the same kernel.
    B2, nbow2, ntopic2, D2 = 2, 136, 648, 200
    kc2, kx2 = jax.random.split(jax.random.PRNGKey(1))
    coeff2 = jax.random.normal(kc2, (B2, nbow2, ntopic2), dtype=jnp.float32)
    x2 = jax.random.normal(kx2, (B2, ntopic2, D2), dtype=jnp.float32)
    out2 = jax.block_until_ready(matrix_reconstruction(coeff2, x2))
    ref2 = jnp.einsum("bnt,btd->bnd", coeff2, x2)
    assert out2.shape == (B2, nbow2, D2)
    assert jnp.allclose(out2, ref2, atol=2e-3, rtol=2e-3)

    print("KERNEL_OK")
</pallas_src>

<mosaic_0001>
module attributes {stable_mosaic.version = 11 : i64} {
  func.func @_bmm_kernel(%arg0: i32, %arg1: i32, %arg2: i32, %arg3: i32, %arg4: memref<1x128x128xf32, #tpu.memory_space<vmem>>, %arg5: memref<1x128x128xf32, #tpu.memory_space<vmem>>, %arg6: memref<1x128x128xf32, #tpu.memory_space<vmem>>, %arg7: memref<128x128xf32, #tpu.memory_space<vmem>>) attributes {dimension_semantics = [#tpu.dimension_semantics<parallel>, #tpu.dimension_semantics<parallel>, #tpu.dimension_semantics<parallel>, #tpu.dimension_semantics<arbitrary>], iteration_bounds = array<i64: 2, 1, 1, 1>, scalar_prefetch = 0 : i64, scratch_operands = 1 : i64, tpu.core_type = #tpu.core_type<tc>, window_params = [{transform_indices = @transform_0, window_bounds = array<i64: 1, 128, 128>}, {transform_indices = @transform_1, window_bounds = array<i64: 1, 128, 128>}, {transform_indices = @transform_2, window_bounds = array<i64: 1, 128, 128>}]} {
    %c0_i32 = arith.constant 0 : i32
    %0 = arith.cmpi eq, %arg3, %c0_i32 : i32
    %1 = arith.extui %0 : i1 to i32
    %c0_i32_0 = arith.constant 0 : i32
    %2 = arith.cmpi ne, %1, %c0_i32_0 : i32
    scf.if %2 {
      %cst_12 = arith.constant 0.000000e+00 : f32
      %14 = vector.broadcast %cst_12 : f32 to vector<128x128xf32>
      %c0_13 = arith.constant 0 : index
      %c0_14 = arith.constant 0 : index
      %15 = vector.load %arg7[%c0_13, %c0_14] : memref<128x128xf32, #tpu.memory_space<vmem>>, vector<128x128xf32>
      tpu.vector_store %arg7[%c0_13, %c0_14], %14 {strides = array<i32>} : memref<128x128xf32, #tpu.memory_space<vmem>>, vector<128x128xf32>,
    } else {
    }
    %c0 = arith.constant 0 : index
    %c0_1 = arith.constant 0 : index
    %3 = vector.load %arg7[%c0, %c0_1] : memref<128x128xf32, #tpu.memory_space<vmem>>, vector<128x128xf32>
    %c0_2 = arith.constant 0 : index
    %c0_3 = arith.constant 0 : index
    %c0_4 = arith.constant 0 : index
    %4 = vector.load %arg4[%c0_2, %c0_3, %c0_4] : memref<1x128x128xf32, #tpu.memory_space<vmem>>, vector<1x128x128xf32>
    %5 = vector.shape_cast %4 : vector<1x128x128xf32> to vector<128x128xf32>
    %c0_5 = arith.constant 0 : index
    %c0_6 = arith.constant 0 : index
    %c0_7 = arith.constant 0 : index
    %6 = vector.load %arg5[%c0_5, %c0_6, %c0_7] : memref<1x128x128xf32, #tpu.memory_space<vmem>>, vector<1x128x128xf32>
    %7 = vector.shape_cast %6 : vector<1x128x128xf32> to vector<128x128xf32>
    %cst = arith.constant dense<0.000000e+00> : vector<128x128xf32>
    %8 = tpu.matmul %5, %7, %cst {dimension_numbers = #tpu.dot_dimension_numbers<[1], [0], [0], [1], [0, 0, 1, 1], [], []>} : vector<128x128xf32>, vector<128x128xf32>, vector<128x128xf32> -> vector<128x128xf32>
    %9 = arith.addf %3, %8 : vector<128x128xf32>
    %c0_8 = arith.constant 0 : index
    %c0_9 = arith.constant 0 : index
    %10 = vector.load %arg7[%c0_8, %c0_9] : memref<128x128xf32, #tpu.memory_space<vmem>>, vector<128x128xf32>
    tpu.vector_store %arg7[%c0_8, %c0_9], %9 {strides = array<i32>} : memref<128x128xf32, #tpu.memory_space<vmem>>, vector<128x128xf32>,
    %c0_i32_10 = arith.constant 0 : i32
    %11 = arith.cmpi eq, %arg3, %c0_i32_10 : i32
    %12 = arith.extui %11 : i1 to i32
    %c0_i32_11 = arith.constant 0 : i32
    %13 = arith.cmpi ne, %12, %c0_i32_11 : i32
    scf.if %13 {
      %c0_12 = arith.constant 0 : index
      %c0_13 = arith.constant 0 : index
      %14 = vector.load %arg7[%c0_12, %c0_13] : memref<128x128xf32, #tpu.memory_space<vmem>>, vector<128x128xf32>
      %c0_14 = arith.constant 0 : index
      %c0_15 = arith.constant 0 : index
      %c0_16 = arith.constant 0 : index
      %15 = vector.load %arg6[%c0_14, %c0_15, %c0_16] : memref<1x128x128xf32, #tpu.memory_space<vmem>>, vector<1x128x128xf32>
      %16 = vector.shape_cast %15 : vector<1x128x128xf32> to vector<128x128xf32>
      %17 = vector.shape_cast %14 : vector<128x128xf32> to vector<1x128x128xf32>
      tpu.vector_store %arg6[%c0_14, %c0_15, %c0_16], %17 {strides = array<i32>} : memref<1x128x128xf32, #tpu.memory_space<vmem>>, vector<1x128x128xf32>,
    } else {
    }
    return
  }
  func.func @transform_0(%arg0: i32, %arg1: i32, %arg2: i32, %arg3: i32) -> (i32, i32, i32) {
    %c0_i32 = arith.constant 0 : i32
    return %arg0, %arg1, %arg3 : i32, i32, i32
  }
  func.func @transform_1(%arg0: i32, %arg1: i32, %arg2: i32, %arg3: i32) -> (i32, i32, i32) {
    %c0_i32 = arith.constant 0 : i32
    return %arg0, %arg3, %arg2 : i32, i32, i32
  }
  func.func @transform_2(%arg0: i32, %arg1: i32, %arg2: i32, %arg3: i32) -> (i32, i32, i32) {
    %c0_i32 = arith.constant 0 : i32
    return %arg0, %arg1, %arg2 : i32, i32, i32
  }
}

</mosaic_0001>

<llo_original>
// kernel: matrix_reconstruction.1
$region0: #{matrix_reconstruction.1}
  #allocation0 [shape = 'u32[]', space=smem, size = 0x4, offset = 0x4, fixed_abs, tag = 'smem constant byte address 0x4 - core index']
  #allocation1 [shape = 'u32[72,128]{1,0:T(1,128)}', space=vmem, size = 0x9000, scoped, tag = 'internal scratch']
  #allocation2 [shape = 'f32[128,128]{1,0:T(8,128)}', space=vmem, size = 0x10000, scoped, tag = 'scratch operand']
  %s0 = inlined_call_operand.vmem [shape: f32[2,128,128], index: 0, kind: input, shape index: {}]
  %s1 = inlined_call_operand.vmem [shape: f32[2,128,128], index: 1, kind: input, shape index: {}]
  %s2 = inlined_call_operand.vmem [shape: f32[2,128,128], index: 2, kind: output, shape index: {}]
  %s3 = sld [smem:[#allocation0]]
  $region49: #{matrix_reconstruction.1} parent=0
    _
  %s5 = ssub.s32 1, %s3
  %s6 = scalar_select 0, %s5, %s3
  loop: start=0, step=1, limit=4
  $region2: #{matrix_reconstruction.1} parent=0 // loop_pre_header
    _
  $region3: #{matrix_reconstruction.1} parent=0 // loop_header
    %s8 = sphi 0, %s12
    %p9 = scmp.ge.s32.totalorder %s8, 4
    %s15 = sphi 0, %s41
    %s16 = sphi 0, %s37
    %s17 = sphi 0, %s33
    %s18 = sphi 0, %s29
    %s19 = sphi 0, %s15
    %s20 = sphi 0, %s16
    %s21 = sphi 0, %s17
    %s22 = sphi 0, %s18
    %s23 = sphi 0, %s19
    %s24 = sphi 0, %s20
    %s25 = sphi 0, %s21
    %s26 = sphi 0, %s22
    %s48 = sphi 0, %s50
    %s51 = sphi 0, %s48
    %s52 = sphi 0, %s51
    %s68 = sphi 0, %s52
    %s78 = sphi 0, %s80
    %s81 = sphi 0, %s78
    %s82 = sphi 0, %s81
    %s98 = sphi 0, %s82
    %s108 = sphi 0, %s110
    %s111 = sphi 0, %s108
    %s112 = sphi 0, %s111
    %s128 = sphi 0, %s112
  $region4: #{matrix_reconstruction.1} parent=0 // loop_header_branch
    %11 = sbr.rel (%p9) target = $region8
  $region5: #{matrix_reconstruction.1} parent=0 // loop_body
    %s13 = ssub.s32 %s8, 1
    %s14 = ssub.s32 %s8, 2
    %s27 = sadd.s32 1, %s18
    %p28 = scmp.ge.s32.totalorder %s27, 1
    %s29 = scalar_select %p28, 0, %s27
    %s30 = sadd.s32 1, %s17
    %s31 = scalar_select %p28, %s30, %s17
    %p32 = scmp.ge.s32.totalorder %s31, 1
    %s33 = scalar_select %p32, 0, %s31
    %s34 = sadd.s32 1, %s16
    %s35 = scalar_select %p32, %s34, %s16
    %p36 = scmp.ge.s32.totalorder %s35, 1
    %s37 = scalar_select %p36, 0, %s35
    %s38 = sadd.s32 1, %s15
    %s39 = scalar_select %p36, %s38, %s15
    %p40 = scmp.ge.s32.totalorder %s39, 2
    %s41 = scalar_select %p40, 0, %s39
    %s42 = ssub.s32 %s15, %s41
    %s43 = ssub.s32 %s16, %s37
    %s44 = sor.u32 %s42, %s43
    %s45 = ssub.s32 %s18, %s29
    %s46 = sor.u32 %s44, %s45
    %p47 = scmp.eq.s32.totalorder %s46, 0
    %s49 = sadd.s32 %s48, 1
    %s50 = scalar_select %p47, %s48, %s49
    %p53 = pneg %p47
    %p54 = scmp.eq.s32.totalorder %s8, 1
    %p55 = por %p53, %p54
    %p56 = scmp.ne.s32.totalorder %s48, %s51
    %p57 = scmp.eq.s32.totalorder %s8, 0
    %p58 = por %p56, %p57
    %p59 = scmp.ne.s32.totalorder %s48, %s51
    %p60 = scmp.eq.s32.totalorder %s13, 1
    %p61 = por %p59, %p60
    %p62 = scmp.ne.s32.totalorder %s51, %s52
    %p63 = scmp.eq.s32.totalorder %s13, 0
    %p64 = por %p62, %p63
    %p65 = scmp.ne.s32.totalorder %s51, %s52
    %p66 = scmp.eq.s32.totalorder %s14, 1
    %p67 = por %p65, %p66
    %p69 = scmp.ne.s32.totalorder %s52, %s68
    %p70 = scmp.eq.s32.totalorder %s14, 0
    %p71 = por %p69, %p70
    %s72 = ssub.s32 %s15, %s41
    %s73 = ssub.s32 %s18, %s29
    %s74 = sor.u32 %s72, %s73
    %s75 = ssub.s32 %s17, %s33
    %s76 = sor.u32 %s74, %s75
    %p77 = scmp.eq.s32.totalorder %s76, 0
    %s79 = sadd.s32 %s78, 1
    %s80 = scalar_select %p77, %s78, %s79
    %p83 = pneg %p77
    %p84 = scmp.eq.s32.totalorder %s8, 1
    %p85 = por %p83, %p84
    %p86 = scmp.ne.s32.totalorder %s78, %s81
    %p87 = scmp.eq.s32.totalorder %s8, 0
    %p88 = por %p86, %p87
    %p89 = scmp.ne.s32.totalorder %s78, %s81
    %p90 = scmp.eq.s32.totalorder %s13, 1
    %p91 = por %p89, %p90
    %p92 = scmp.ne.s32.totalorder %s81, %s82
    %p93 = scmp.eq.s32.totalorder %s13, 0
    %p94 = por %p92, %p93
    %p95 = scmp.ne.s32.totalorder %s81, %s82
    %p96 = scmp.eq.s32.totalorder %s14, 1
    %p97 = por %p95, %p96
    %p99 = scmp.ne.s32.totalorder %s82, %s98
    %p100 = scmp.eq.s32.totalorder %s14, 0
    %p101 = por %p99, %p100
    %s102 = ssub.s32 %s15, %s41
    %s103 = ssub.s32 %s16, %s37
    %s104 = sor.u32 %s102, %s103
    %s105 = ssub.s32 %s17, %s33
    %s106 = sor.u32 %s104, %s105
    %p107 = scmp.eq.s32.totalorder %s106, 0
    %s109 = sadd.s32 %s108, 1
    %s110 = scalar_select %p107, %s108, %s109
    %p113 = pneg %p107
    %p114 = scmp.eq.s32.totalorder %s8, 1
    %p115 = por %p113, %p114
    %p116 = scmp.ne.s32.totalorder %s108, %s111
    %p117 = scmp.eq.s32.totalorder %s8, 0
    %p118 = por %p116, %p117
    %p119 = scmp.ne.s32.totalorder %s108, %s111
    %p120 = scmp.eq.s32.totalorder %s13, 1
    %p121 = por %p119, %p120
    %p122 = scmp.ne.s32.totalorder %s111, %s112
    %p123 = scmp.eq.s32.totalorder %s13, 0
    %p124 = por %p122, %p123
    %p125 = scmp.ne.s32.totalorder %s111, %s112
    %p126 = scmp.eq.s32.totalorder %s14, 1
    %p127 = por %p125, %p126
    %p129 = scmp.ne.s32.totalorder %s112, %s128
    %p130 = scmp.eq.s32.totalorder %s14, 0
    %p131 = por %p129, %p130
    %p132 = scmp.le.s32.totalorder 1, %s8
    %p133 = scmp.lt.s32.totalorder %s8, 3
    %p134 = pnand %p132, %p133
    %p135 = pneg %p134
    // Predicated region
    $region9: #{matrix_reconstruction.1} parent=5 // pred_check
      _
    $region10: #{matrix_reconstruction.1} parent=5 // pred_check_branch
      %137 = sbr.rel (%p134) target = $region12
    $region11: #{matrix_reconstruction.1} parent=5 // pred_region
      %s138 = ssub.s32 %s8, 1
    $region12: #{matrix_reconstruction.1} parent=5 // pred_fallthru
      _
    %p139 = scmp.lt.s32.totalorder %s8, 2
    // Predicated region
    $region13: #{matrix_reconstruction.1} parent=5 // pred_check
      %p140 = pneg %p139
    $region14: #{matrix_reconstruction.1} parent=5 // pred_check_branch
      %142 = sbr.rel (%p140) target = $region16
    $region15: #{matrix_reconstruction.1} parent=5 // pred_region
      // Predicated region
      $region17: #{matrix_reconstruction.1} parent=15 // pred_check
        %p143 = pneg %p58
      $region18: #{matrix_reconstruction.1} parent=15 // pred_check_branch
        %145 = sbr.rel (%p143) target = $region20
      $region19: #{matrix_reconstruction.1} parent=15 // pred_region
        %s146 = smul.u32 16, %s16
        %p147 = scmp.lt.s32.totalorder %s15, 1
        %s148 = scalar_select %p147, %s15, 1
        %p149 = scmp.lt.s32.totalorder %s146, 15
        %s150 = scalar_select %p149, %s146, 15
        %p151 = scmp.lt.s32.totalorder %s18, 0
        %s152 = scalar_select %p151, %s18, 0
        %s153 = sadd.s32 %s152, %s150
        %s154 = smul.addr %s148, 16
        %s155 = sadd.s32 %s153, %s154
        %s156 = smul.addr %s155, 8
        %s157 = scalar_lea.vmem %s0, %s156
        %s158 = smul.u32 16, %s16
      $region20: #{matrix_reconstruction.1} parent=15 // pred_fallthru
        _
      // Predicated region
      $region21: #{matrix_reconstruction.1} parent=15 // pred_check
        %p159 = pneg %p88
      $region22: #{matrix_reconstruction.1} parent=15 // pred_check_branch
        %161 = sbr.rel (%p159) target = $region24
      $region23: #{matrix_reconstruction.1} parent=15 // pred_region
        %s162 = smul.u32 16, %s18
        %p163 = scmp.lt.s32.totalorder %s15, 1
        %s164 = scalar_select %p163, %s15, 1
        %p165 = scmp.lt.s32.totalorder %s162, 15
        %s166 = scalar_select %p165, %s162, 15
        %p167 = scmp.lt.s32.totalorder %s17, 0
        %s168 = scalar_select %p167, %s17, 0
        %s169 = sadd.s32 %s168, %s166
        %s170 = smul.addr %s164, 16
        %s171 = sadd.s32 %s169, %s170
        %s172 = smul.addr %s171, 8
        %s173 = scalar_lea.vmem %s1, %s172
        %s174 = smul.u32 16, %s18
      $region24: #{matrix_reconstruction.1} parent=15 // pred_fallthru
        _
    $region16: #{matrix_reconstruction.1} parent=5 // pred_fallthru
      _
    %p175 = scmp.le.s32.totalorder 1, %s8
    %p176 = scmp.lt.s32.totalorder %s8, 3
    %p177 = pnand %p175, %p176
    %p178 = pneg %p177
    // Predicated region
    $region25: #{matrix_reconstruction.1} parent=5 // pred_check
      _
    $region26: #{matrix_reconstruction.1} parent=5 // pred_check_branch
      %180 = sbr.rel (%p177) target = $region28
    $region27: #{matrix_reconstruction.1} parent=5 // pred_region
      %s181 = ssub.s32 %s8, 1
      %s182 = smul.u32 16, %s20
      %p183 = scmp.lt.s32.totalorder %s19, 1
      %s184 = scalar_select %p183, %s19, 1
      %p185 = scmp.lt.s32.totalorder %s182, 15
      %s186 = scalar_select %p185, %s182, 15
      %p187 = scmp.lt.s32.totalorder %s22, 0
      %s188 = scalar_select %p187, %s22, 0
      %s189 = sadd.s32 %s188, %s186
      %s190 = smul.addr %s184, 16
      %s191 = sadd.s32 %s189, %s190
      %s192 = smul.addr %s191, 8
      %s193 = scalar_lea.vmem %s0, %s192
      %p194 = pneg %p64
      %p195 = pneg %p61
      %s196 = smul.u32 16, %s22
      %p197 = scmp.lt.s32.totalorder %s19, 1
      %s198 = scalar_select %p197, %s19, 1
      %p199 = scmp.lt.s32.totalorder %s196, 15
      %s200 = scalar_select %p199, %s196, 15
      %p201 = scmp.lt.s32.totalorder %s21, 0
      %s202 = scalar_select %p201, %s21, 0
      %s203 = sadd.s32 %s202, %s200
      %s204 = smul.addr %s198, 16
      %s205 = sadd.s32 %s203, %s204
      %s206 = smul.addr %s205, 8
      %s207 = scalar_lea.vmem %s1, %s206
      %p208 = pneg %p94
      %p209 = pneg %p91
      %p210 = pneg %p124
      %p211 = pneg %p121
      %s212 = smul.u32 16, %s20
      %p213 = scmp.lt.s32.totalorder %s19, 1
      %s214 = scalar_select %p213, %s19, 1
      %p215 = scmp.lt.s32.totalorder %s212, 15
      %s216 = scalar_select %p215, %s212, 15
      %p217 = scmp.lt.s32.totalorder %s21, 0
      %s218 = scalar_select %p217, %s21, 0
      %s219 = sadd.s32 %s218, %s216
      %s220 = smul.addr %s214, 16
      %s221 = sadd.s32 %s219, %s220
      %s222 = smul.addr %s221, 8
      %s223 = scalar_lea.vmem %s2, %s222
      %s224 = smul.u32 16, %s20
      %p225 = scmp.lt.s32.totalorder %s19, 1
      %s226 = scalar_select %p225, %s19, 1
      %p227 = scmp.lt.s32.totalorder %s224, 15
      %s228 = scalar_select %p227, %s224, 15
      %p229 = scmp.lt.s32.totalorder %s22, 0
      %s230 = scalar_select %p229, %s22, 0
      %s231 = sadd.s32 %s230, %s228
      %s232 = smul.addr %s226, 16
      %s233 = sadd.s32 %s231, %s232
      %s234 = smul.addr %s233, 8
      %s235 = scalar_lea.vmem %s0, %s234
      %s236 = smul.u32 16, %s20
      %s237 = smul.u32 16, %s22
      %p238 = scmp.lt.s32.totalorder %s19, 1
      %s239 = scalar_select %p238, %s19, 1
      %p240 = scmp.lt.s32.totalorder %s237, 15
      %s241 = scalar_select %p240, %s237, 15
      %p242 = scmp.lt.s32.totalorder %s21, 0
      %s243 = scalar_select %p242, %s21, 0
      %s244 = sadd.s32 %s243, %s241
      %s245 = smul.addr %s239, 16
      %s246 = sadd.s32 %s244, %s245
      %s247 = smul.addr %s246, 8
      %s248 = scalar_lea.vmem %s1, %s247
      %s249 = smul.u32 16, %s22
      %s250 = smul.u32 16, %s20
      %p251 = scmp.lt.s32.totalorder %s19, 1
      %s252 = scalar_select %p251, %s19, 1
      %p253 = scmp.lt.s32.totalorder %s250, 15
      %s254 = scalar_select %p253, %s250, 15
      %p255 = scmp.lt.s32.totalorder %s21, 0
      %s256 = scalar_select %p255, %s21, 0
      %s257 = sadd.s32 %s256, %s254
      %s258 = smul.addr %s252, 16
      %s259 = sadd.s32 %s257, %s258
      %s260 = smul.addr %s259, 8
      %s261 = scalar_lea.vmem %s2, %s260
      %s262 = smul.u32 16, %s20
      %p263 = scmp.eq.s32.totalorder %s22, 0
      // Predicated region
      $region29: #{matrix_reconstruction.1} parent=27 // pred_check
        %p264 = pneg %p263
      $region30: #{matrix_reconstruction.1} parent=27 // pred_check_branch
        %266 = sbr.rel (%p264) target = $region32
      $region31: #{matrix_reconstruction.1} parent=27 // pred_region
        %267 = vst [vmem:[#allocation2] sm:$0xff] 0.0
        %268 = vst [vmem:[#allocation2 + $0x8] sm:$0xff] 0.0
        %269 = vst [vmem:[#allocation2 + $0x10] sm:$0xff] 0.0
        %270 = vst [vmem:[#allocation2 + $0x18] sm:$0xff] 0.0
        %271 = vst [vmem:[#allocation2 + $0x20] sm:$0xff] 0.0
        %272 = vst [vmem:[#allocation2 + $0x28] sm:$0xff] 0.0
        %273 = vst [vmem:[#allocation2 + $0x30] sm:$0xff] 0.0
        %274 = vst [vmem:[#allocation2 + $0x38] sm:$0xff] 0.0
        %275 = vst [vmem:[#allocation2 + $0x40] sm:$0xff] 0.0
        %276 = vst [vmem:[#allocation2 + $0x48] sm:$0xff] 0.0
        %277 = vst [vmem:[#allocation2 + $0x50] sm:$0xff] 0.0
        %278 = vst [vmem:[#allocation2 + $0x58] sm:$0xff] 0.0
        %279 = vst [vmem:[#allocation2 + $0x60] sm:$0xff] 0.0
        %280 = vst [vmem:[#allocation2 + $0x68] sm:$0xff] 0.0
        %281 = vst [vmem:[#allocation2 + $0x70] sm:$0xff] 0.0
        %282 = vst [vmem:[#allocation2 + $0x78] sm:$0xff] 0.0
      $region32: #{matrix_reconstruction.1} parent=27 // pred_fallthru
        _
      %v283 = vld [vmem:[#allocation2] sm:$0xff]
      %v284 = vld [vmem:[#allocation2 + $0x8] sm:$0xff]
      %v285 = vld [vmem:[#allocation2 + $0x10] sm:$0xff]
      %v286 = vld [vmem:[#allocation2 + $0x18] sm:$0xff]
      %v287 = vld [vmem:[#allocation2 + $0x20] sm:$0xff]
      %v288 = vld [vmem:[#allocation2 + $0x28] sm:$0xff]
      %v289 = vld [vmem:[#allocation2 + $0x30] sm:$0xff]
      %v290 = vld [vmem:[#allocation2 + $0x38] sm:$0xff]
      %v291 = vld [vmem:[#allocation2 + $0x40] sm:$0xff]
      %v292 = vld [vmem:[#allocation2 + $0x48] sm:$0xff]
      %v293 = vld [vmem:[#allocation2 + $0x50] sm:$0xff]
      %v294 = vld [vmem:[#allocation2 + $0x58] sm:$0xff]
      %v295 = vld [vmem:[#allocation2 + $0x60] sm:$0xff]
      %v296 = vld [vmem:[#allocation2 + $0x68] sm:$0xff]
      %v297 = vld [vmem:[#allocation2 + $0x70] sm:$0xff]
      %v298 = vld [vmem:[#allocation2 + $0x78] sm:$0xff]
      %v299 = vld [vmem:[%s235] sm:$0xff]
      %v300 = vld [vmem:[%s235 + $0x8] sm:$0xff]
      %v301 = vld [vmem:[%s235 + $0x10] sm:$0xff]
      %v302 = vld [vmem:[%s235 + $0x18] sm:$0xff]
      %v303 = vld [vmem:[%s235 + $0x20] sm:$0xff]
      %v304 = vld [vmem:[%s235 + $0x28] sm:$0xff]
      %v305 = vld [vmem:[%s235 + $0x30] sm:$0xff]
      %v306 = vld [vmem:[%s235 + $0x38] sm:$0xff]
      %v307 = vld [vmem:[%s235 + $0x40] sm:$0xff]
      %v308 = vld [vmem:[%s235 + $0x48] sm:$0xff]
      %v309 = vld [vmem:[%s235 + $0x50] sm:$0xff]
      %v310 = vld [vmem:[%s235 + $0x58] sm:$0xff]
      %v311 = vld [vmem:[%s235 + $0x60] sm:$0xff]
      %v312 = vld [vmem:[%s235 + $0x68] sm:$0xff]
      %v313 = vld [vmem:[%s235 + $0x70] sm:$0xff]
      %v314 = vld [vmem:[%s235 + $0x78] sm:$0xff]
      %v315 = vld [vmem:[%s248] sm:$0xff]
      %v316 = vld [vmem:[%s248 + $0x8] sm:$0xff]
      %v317 = vld [vmem:[%s248 + $0x10] sm:$0xff]
      %v318 = vld [vmem:[%s248 + $0x18] sm:$0xff]
      %v319 = vld [vmem:[%s248 + $0x20] sm:$0xff]
      %v320 = vld [vmem:[%s248 + $0x28] sm:$0xff]
      %v321 = vld [vmem:[%s248 + $0x30] sm:$0xff]
      %v322 = vld [vmem:[%s248 + $0x38] sm:$0xff]
      %v323 = vld [vmem:[%s248 + $0x40] sm:$0xff]
      %v324 = vld [vmem:[%s248 + $0x48] sm:$0xff]
      %v325 = vld [vmem:[%s248 + $0x50] sm:$0xff]
      %v326 = vld [vmem:[%s248 + $0x58] sm:$0xff]
      %v327 = vld [vmem:[%s248 + $0x60] sm:$0xff]
      %v328 = vld [vmem:[%s248 + $0x68] sm:$0xff]
      %v329 = vld [vmem:[%s248 + $0x70] sm:$0xff]
      %v330 = vld [vmem:[%s248 + $0x78] sm:$0xff]
      %331 = vmatpush.msra.mxu0 %v330
      %332 = vmatpush.msra.mxu0 %v329
      %333 = vmatpush.msra.mxu0 %v328
      %334 = vmatpush.msra.mxu0 %v327
      %335 = vmatpush.msra.mxu0 %v326
      %336 = vmatpush.msra.mxu0 %v325
      %337 = vmatpush.msra.mxu0 %v324
      %338 = vmatpush.msra.mxu0 %v323
      %339 = vmatpush.msra.mxu0 %v322
      %340 = vmatpush.msra.mxu0 %v321
      %341 = vmatpush.msra.mxu0 %v320
      %342 = vmatpush.msra.mxu0 %v319
      %343 = vmatpush.msra.mxu0 %v318
      %344 = vmatpush.msra.mxu0 %v317
      %345 = vmatpush.msra.mxu0 %v316
      %346 = vmatpush.msra.mxu0 %v315
      %347 = vmatmul.f32.gmra.mxu0 %v299
      %v348 = vpop.f32.mrf.mxu0
      %v349 = vadd.f32 0.0, %v348
      %350 = vmatmul.f32.gmra.mxu0 %v300
      %v351 = vpop.f32.mrf.mxu0
      %v352 = vadd.f32 0.0, %v351
      %353 = vmatmul.f32.gmra.mxu0 %v301
      %v354 = vpop.f32.mrf.mxu0
      %v355 = vadd.f32 0.0, %v354
      %356 = vmatmul.f32.gmra.mxu0 %v302
      %v357 = vpop.f32.mrf.mxu0
      %v358 = vadd.f32 0.0, %v357
      %359 = vmatmul.f32.gmra.mxu0 %v303
      %v360 = vpop.f32.mrf.mxu0
      %v361 = vadd.f32 0.0, %v360
      %362 = vmatmul.f32.gmra.mxu0 %v304
      %v363 = vpop.f32.mrf.mxu0
      %v364 = vadd.f32 0.0, %v363
      %365 = vmatmul.f32.gmra.mxu0 %v305
      %v366 = vpop.f32.mrf.mxu0
      %v367 = vadd.f32 0.0, %v366
      %368 = vmatmul.f32.gmra.mxu0 %v306
      %v369 = vpop.f32.mrf.mxu0
      %v370 = vadd.f32 0.0, %v369
      %371 = vmatmul.f32.gmra.mxu0 %v307
      %v372 = vpop.f32.mrf.mxu0
      %v373 = vadd.f32 0.0, %v372
      %374 = vmatmul.f32.gmra.mxu0 %v308
      %v375 = vpop.f32.mrf.mxu0
      %v376 = vadd.f32 0.0, %v375
      %377 = vmatmul.f32.gmra.mxu0 %v309
      %v378 = vpop.f32.mrf.mxu0
      %v379 = vadd.f32 0.0, %v378
      %380 = vmatmul.f32.gmra.mxu0 %v310
      %v381 = vpop.f32.mrf.mxu0
      %v382 = vadd.f32 0.0, %v381
      %383 = vmatmul.f32.gmra.mxu0 %v311
      %v384 = vpop.f32.mrf.mxu0
      %v385 = vadd.f32 0.0, %v384
      %386 = vmatmul.f32.gmra.mxu0 %v312
      %v387 = vpop.f32.mrf.mxu0
      %v388 = vadd.f32 0.0, %v387
      %389 = vmatmul.f32.gmra.mxu0 %v313
      %v390 = vpop.f32.mrf.mxu0
      %v391 = vadd.f32 0.0, %v390
      %392 = vmatmul.f32.gmra.mxu0 %v314
      %v393 = vpop.f32.mrf.mxu0
      %v394 = vadd.f32 0.0, %v393
      %395 = vdwg.mxu0
      %v396 = vadd.f32 %v283, %v349
      %v397 = vadd.f32 %v284, %v352
      %v398 = vadd.f32 %v285, %v355
      %v399 = vadd.f32 %v286, %v358
      %v400 = vadd.f32 %v287, %v361
      %v401 = vadd.f32 %v288, %v364
      %v402 = vadd.f32 %v289, %v367
      %v403 = vadd.f32 %v290, %v370
      %v404 = vadd.f32 %v291, %v373
      %v405 = vadd.f32 %v292, %v376
      %v406 = vadd.f32 %v293, %v379
      %v407 = vadd.f32 %v294, %v382
      %v408 = vadd.f32 %v295, %v385
      %v409 = vadd.f32 %v296, %v388
      %v410 = vadd.f32 %v297, %v391
      %v411 = vadd.f32 %v298, %v394
      %412 = vst [vmem:[#allocation2] sm:$0xff] %v396
      %413 = vst [vmem:[#allocation2 + $0x8] sm:$0xff] %v397
      %414 = vst [vmem:[#allocation2 + $0x10] sm:$0xff] %v398
      %415 = vst [vmem:[#allocation2 + $0x18] sm:$0xff] %v399
      %416 = vst [vmem:[#allocation2 + $0x20] sm:$0xff] %v400
      %417 = vst [vmem:[#allocation2 + $0x28] sm:$0xff] %v401
      %418 = vst [vmem:[#allocation2 + $0x30] sm:$0xff] %v402
      %419 = vst [vmem:[#allocation2 + $0x38] sm:$0xff] %v403
      %420 = vst [vmem:[#allocation2 + $0x40] sm:$0xff] %v404
      %421 = vst [vmem:[#allocation2 + $0x48] sm:$0xff] %v405
      %422 = vst [vmem:[#allocation2 + $0x50] sm:$0xff] %v406
      %423 = vst [vmem:[#allocation2 + $0x58] sm:$0xff] %v407
      %424 = vst [vmem:[#allocation2 + $0x60] sm:$0xff] %v408
      %425 = vst [vmem:[#allocation2 + $0x68] sm:$0xff] %v409
      %426 = vst [vmem:[#allocation2 + $0x70] sm:$0xff] %v410
      %427 = vst [vmem:[#allocation2 + $0x78] sm:$0xff] %v411
      // Predicated region
      $region33: #{matrix_reconstruction.1} parent=27 // pred_check
        %p428 = pneg %p263
      $region34: #{matrix_reconstruction.1} parent=27 // pred_check_branch
        %430 = sbr.rel (%p428) target = $region36
      $region35: #{matrix_reconstruction.1} parent=27 // pred_region
        %v431 = vld [vmem:[#allocation2] sm:$0xff]
        %v432 = vld [vmem:[#allocation2 + $0x8] sm:$0xff]
        %v433 = vld [vmem:[#allocation2 + $0x10] sm:$0xff]
        %v434 = vld [vmem:[#allocation2 + $0x18] sm:$0xff]
        %v435 = vld [vmem:[#allocation2 + $0x20] sm:$0xff]
        %v436 = vld [vmem:[#allocation2 + $0x28] sm:$0xff]
        %v437 = vld [vmem:[#allocation2 + $0x30] sm:$0xff]
        %v438 = vld [vmem:[#allocation2 + $0x38] sm:$0xff]
        %v439 = vld [vmem:[#allocation2 + $0x40] sm:$0xff]
        %v440 = vld [vmem:[#allocation2 + $0x48] sm:$0xff]
        %v441 = vld [vmem:[#allocation2 + $0x50] sm:$0xff]
        %v442 = vld [vmem:[#allocation2 + $0x58] sm:$0xff]
        %v443 = vld [vmem:[#allocation2 + $0x60] sm:$0xff]
        %v444 = vld [vmem:[#allocation2 + $0x68] sm:$0xff]
        %v445 = vld [vmem:[#allocation2 + $0x70] sm:$0xff]
        %v446 = vld [vmem:[#allocation2 + $0x78] sm:$0xff]
        %447 = vst [vmem:[%s261] sm:$0xff] %v431
        %448 = vst [vmem:[%s261 + $0x8] sm:$0xff] %v432
        %449 = vst [vmem:[%s261 + $0x10] sm:$0xff] %v433
        %450 = vst [vmem:[%s261 + $0x18] sm:$0xff] %v434
        %451 = vst [vmem:[%s261 + $0x20] sm:$0xff] %v435
        %452 = vst [vmem:[%s261 + $0x28] sm:$0xff] %v436
        %453 = vst [vmem:[%s261 + $0x30] sm:$0xff] %v437
        %454 = vst [vmem:[%s261 + $0x38] sm:$0xff] %v438
        %455 = vst [vmem:[%s261 + $0x40] sm:$0xff] %v439
        %456 = vst [vmem:[%s261 + $0x48] sm:$0xff] %v440
        %457 = vst [vmem:[%s261 + $0x50] sm:$0xff] %v441
        %458 = vst [vmem:[%s261 + $0x58] sm:$0xff] %v442
        %459 = vst [vmem:[%s261 + $0x60] sm:$0xff] %v443
        %460 = vst [vmem:[%s261 + $0x68] sm:$0xff] %v444
        %461 = vst [vmem:[%s261 + $0x70] sm:$0xff] %v445
        %462 = vst [vmem:[%s261 + $0x78] sm:$0xff] %v446
      $region36: #{matrix_reconstruction.1} parent=27 // pred_fallthru
        _
      %s463 = smul.u32 16, %s20
      %p464 = scmp.lt.s32.totalorder %s19, 1
      %s465 = scalar_select %p464, %s19, 1
      %p466 = scmp.lt.s32.totalorder %s463, 15
      %s467 = scalar_select %p466, %s463, 15
      %p468 = scmp.lt.s32.totalorder %s21, 0
      %s469 = scalar_select %p468, %s21, 0
      %s470 = sadd.s32 %s469, %s467
      %s471 = smul.addr %s465, 16
      %s472 = sadd.s32 %s470, %s471
      %s473 = smul.addr %s472, 8
      %s474 = scalar_lea.vmem %s2, %s473
      // Predicated region
      $region37: #{matrix_reconstruction.1} parent=27 // pred_check
        %p475 = pneg %p121
      $region38: #{matrix_reconstruction.1} parent=27 // pred_check_branch
        %477 = sbr.rel (%p475) target = $region40
      $region39: #{matrix_reconstruction.1} parent=27 // pred_region
        %s478 = smul.u32 16, %s20
      $region40: #{matrix_reconstruction.1} parent=27 // pred_fallthru
        _
    $region28: #{matrix_reconstruction.1} parent=5 // pred_fallthru
      _
    %p479 = scmp.le.s32.totalorder 2, %s8
    // Predicated region
    $region41: #{matrix_reconstruction.1} parent=5 // pred_check
      %p480 = pneg %p479
    $region42: #{matrix_reconstruction.1} parent=5 // pred_check_branch
      %482 = sbr.rel (%p480) target = $region44
    $region43: #{matrix_reconstruction.1} parent=5 // pred_region
      %s483 = ssub.s32 %s8, 2
      // Predicated region
      $region45: #{matrix_reconstruction.1} parent=43 // pred_check
        %p484 = pneg %p127
      $region46: #{matrix_reconstruction.1} parent=43 // pred_check_branch
        %486 = sbr.rel (%p484) target = $region48
      $region47: #{matrix_reconstruction.1} parent=43 // pred_region
        %s487 = smul.u32 16, %s24
        %p488 = scmp.lt.s32.totalorder %s23, 1
        %s489 = scalar_select %p488, %s23, 1
        %p490 = scmp.lt.s32.totalorder %s487, 15
        %s491 = scalar_select %p490, %s487, 15
        %p492 = scmp.lt.s32.totalorder %s25, 0
        %s493 = scalar_select %p492, %s25, 0
        %s494 = sadd.s32 %s493, %s491
        %s495 = smul.addr %s489, 16
        %s496 = sadd.s32 %s494, %s495
        %s497 = smul.addr %s496, 8
        %s498 = scalar_lea.vmem %s2, %s497
      $region48: #{matrix_reconstruction.1} parent=43 // pred_fallthru
        _
    $region44: #{matrix_reconstruction.1} parent=5 // pred_fallthru
      _
  $region6: #{matrix_reconstruction.1} parent=0 // loop_footer
    %s12 = sadd.s32 1, %s8
  $region7: #{matrix_reconstruction.1} parent=0 // loop_footer_branch
    %7 = sbr.rel target = $region3
  $region8: #{matrix_reconstruction.1} parent=0 // loop_exit
    _

</llo_original>
